<compile_context>
chip_gen: v6e
topology: v6e:2x2x1
jax: 0.10.0
libtpu: 0.0.40
codegen_flags: <defaults>
</compile_context>

<pallas_src>
import jax
import jax.numpy as jnp
from jax import lax
from jax.experimental import pallas as pl
from jax.experimental.pallas import tpu as pltpu


def _round_up(x, m):
    return (x + m - 1) // m * m


def _make_kernel(K, Cin, Cout, M, imgs_per_block, out_dtype):
    KC = K * Cin          # rows per kw-tap after the wrapper's kh pre-stack
    KKC = K * K * Cin     # full im2col contraction depth

    def kernel(x_ref, w_ref, aff_ref, o_ref, col_ref):
        # x_ref:   (imgs_per_block, K*Cin, Lp) bf16  kh-prestacked, zero-padded rows
        # w_ref:   (Cout, K*K*Cin)             bf16  im2col weight matrix
        # aff_ref: (3, Cout, 1)                f32   [conv_bias, bn_scale, bn_shift]
        # o_ref:   (imgs_per_block, Cout, M)   out_dtype  lane-dense output (col = h*Wp + w)
        # col_ref: (K*K*Cin, M)                bf16  VMEM im2col scratch (reused per image)
        w = w_ref[...]
        bias = aff_ref[0]
        scale = aff_ref[1]
        shift = aff_ref[2]
        for n in range(imgs_per_block):
            # Only the K small lane (kw) shifts remain in-kernel: 5 shifted copies into the
            # stacked im2col scratch, then one 100-deep MXU contraction.
            for kw in range(K):
                col_ref[kw * KC:(kw + 1) * KC, :] = x_ref[n, :, kw:kw + M]
            acc = jnp.dot(w, col_ref[...], preferred_element_type=jnp.float32)  # (Cout, M)
            acc = jnp.maximum(acc + bias, 0.0)       # conv bias + ReLU (f32)
            acc = acc * scale + shift                # BatchNorm2d (eval, folded affine)
            # TODO(synk): Dropout(p=0.4) is identity in eval mode; training-mode dropout
            # masking and batch-stat BatchNorm are not implemented here.
            o_ref[n, :, :] = acc.astype(out_dtype)

    return kernel


def conv_relu_bn_dropout(x_nchw, weight_oihw, conv_bias, gamma, beta,
                         running_mean, running_var, eps=1e-5,
                         out_dtype=jnp.bfloat16, imgs_per_block=None):
    """Eval-mode forward of Conv_Relu_BatchNorm_Dropout. Input NCHW f32, output NCHW out_dtype."""
    N, Cin, H, W = x_nchw.shape
    Cout, Cin2, K, K2 = weight_oihw.shape
    assert Cin2 == Cin and K2 == K
    pad = K // 2
    Hp, Wp = H + 2 * pad, W + 2 * pad
    KC, KKC = K * Cin, K * K * Cin

    # Lane-dense sizes: M output columns per image (covers all flat indices h*Wp + w),
    # Lp per-row length covering the largest in-kernel kw shift.
    M = _round_up(Hp * W + (H - Hp) * 0, 128)                 # noqa: readability below
    M = _round_up(H * Wp, 128)
    Lp = _round_up(M + (K - 1), 128)

    # Default batching: fold the batch into ~2 wide lane-dense blocks
    # (minimal per-step overhead on single-TC v5e/v6e, >=2 parallel units for v7x).
    if imgs_per_block is None:
        target = max(1, -(-N // 2))
        imgs_per_block = 1
        for d in range(target, 0, -1):
            if N % d == 0:
                imgs_per_block = d
                break
    assert N % imgs_per_block == 0
    num_blocks = N // imgs_per_block

    # ---- wrapper glue (cheap at these sizes; see in-kernel-padding TODO above) ----
    # Zero-pad spatially, flatten (Hp,Wp)->Hp*Wp, tail-pad so every kh-shifted window of
    # length Lp is in-bounds, cast to the bf16 MXU operand dtype.
    x_pad = jnp.pad(x_nchw, ((0, 0), (0, 0), (pad, pad), (pad, pad)))
    x_flat = x_pad.reshape(N, Cin, Hp * Wp)
    Ltot = (K - 1) * Wp + Lp
    x_flat = jnp.pad(x_flat, ((0, 0), (0, 0), (0, Ltot - Hp * Wp))).astype(jnp.bfloat16)
    # Pre-stack the K row (kh) shifts: row index = kh*Cin + c.  Only a 5x replication
    # (vs 25x for full im2col); the kw shifts stay in-kernel.
    x_stk = jnp.stack([x_flat[:, :, kh * Wp: kh * Wp + Lp] for kh in range(K)], axis=1)
    x_stk = x_stk.reshape(N, KC, Lp)

    # Weights: (Cout, Cin, Kh, Kw) -> (Cout, Kw, Kh, Cin) -> (Cout, K*K*Cin) so that
    # column index kw*K*Cin + kh*Cin + c matches the in-kernel im2col row order.
    w2 = jnp.transpose(weight_oihw, (0, 3, 2, 1)).reshape(Cout, KKC).astype(jnp.bfloat16)

    # Fold eval-mode BatchNorm into per-channel scale/shift; stack with the conv bias.
    inv_std = lax.rsqrt(running_var.astype(jnp.float32) + eps)
    scale = gamma.astype(jnp.float32) * inv_std
    shift = beta.astype(jnp.float32) - running_mean.astype(jnp.float32) * scale
    aff = jnp.stack([conv_bias.astype(jnp.float32), scale, shift]).reshape(3, Cout, 1)

    kernel = _make_kernel(K, Cin, Cout, M, imgs_per_block, out_dtype)
    out_flat = pl.pallas_call(
        kernel,
        out_shape=jax.ShapeDtypeStruct((N, Cout, M), out_dtype),
        grid_spec=pltpu.PrefetchScalarGridSpec(
            num_scalar_prefetch=0,
            grid=(num_blocks,),
            in_specs=[
                pl.BlockSpec((imgs_per_block, KC, Lp), lambda i: (i, 0, 0)),
                pl.BlockSpec((Cout, KKC), lambda i: (0, 0)),
                pl.BlockSpec((3, Cout, 1), lambda i: (0, 0, 0)),
            ],
            out_specs=pl.BlockSpec((imgs_per_block, Cout, M), lambda i: (i, 0, 0)),
            scratch_shapes=[pltpu.VMEM((KKC, M), jnp.bfloat16)],
        ),
        compiler_params=pltpu.CompilerParams(
            dimension_semantics=("parallel",)),
    )(x_stk, w2, aff)

    # Valid pixels live at flat column h*Wp + w; the channel dim is already the sublane
    # axis so this slice yields NCHW with no transpose.
    out = out_flat[:, :, :H * Wp].reshape(N, Cout, H, Wp)[:, :, :, :W]
    return out


def _reference(x_nchw, weight_oihw, conv_bias, gamma, beta,
               running_mean, running_var, eps=1e-5):
    K = weight_oihw.shape[-1]
    pad = K // 2
    y = lax.conv_general_dilated(
        x_nchw, weight_oihw, window_strides=(1, 1),
        padding=((pad, pad), (pad, pad)),
        dimension_numbers=("NCHW", "OIHW", "NCHW"),
        precision=lax.Precision.HIGHEST)
    y = y + conv_bias[None, :, None, None]
    y = jnp.maximum(y, 0.0)
    inv = 1.0 / jnp.sqrt(running_var + eps)
    y = (y - running_mean[None, :, None, None]) * inv[None, :, None, None]
    y = y * gamma[None, :, None, None] + beta[None, :, None, None]
    return y  # Dropout = identity in eval mode


if __name__ == "__main__":
    # Shapes consistent with the module: input_dim=4, hidden_dims=32, K=5.
    N, Cin, H, W = 2, 4, 16, 16
    Cout, K = 32, 5

    key = jax.random.PRNGKey(0)
    kx, kw, kb, kg, kbeta, km, kv = jax.random.split(key, 7)

    x = jax.random.normal(kx, (N, Cin, H, W), jnp.float32)
    fan_in = Cin * K * K
    weight = jax.random.normal(kw, (Cout, Cin, K, K), jnp.float32) / jnp.sqrt(fan_in)
    conv_bias = 0.1 * jax.random.normal(kb, (Cout,), jnp.float32)
    gamma = 1.0 + 0.1 * jax.random.normal(kg, (Cout,), jnp.float32)
    beta = 0.1 * jax.random.normal(kbeta, (Cout,), jnp.float32)
    running_mean = 0.1 * jax.random.normal(km, (Cout,), jnp.float32)
    running_var = jax.random.uniform(kv, (Cout,), jnp.float32, minval=0.5, maxval=1.5)

    out = conv_relu_bn_dropout(x, weight, conv_bias, gamma, beta,
                               running_mean, running_var)
    out = jax.block_until_ready(out)
    assert out.shape == (N, Cout, H, W), out.shape
    out_f = out.astype(jnp.float32)

    # (a) Structural check: reference fed the same bf16-rounded MXU operands; remaining
    #     differences are f32 accumulation order + the bf16 output rounding.
    xq = x.astype(jnp.bfloat16).astype(jnp.float32)
    wq = weight.astype(jnp.bfloat16).astype(jnp.float32)
    ref_q = _reference(xq, wq, conv_bias, gamma, beta, running_mean, running_var)
    ref_q = jax.block_until_ready(ref_q)
    err_q = float(jnp.max(jnp.abs(out_f - ref_q)))
    assert jnp.allclose(out_f, ref_q, rtol=2e-2, atol=2e-2), err_q

    # (b) Semantics check vs. full-f32 reference (bf16 MXU operands + bf16 output -> looser tol).
    ref_f = _reference(x, weight, conv_bias, gamma, beta, running_mean, running_var)
    ref_f = jax.block_until_ready(ref_f)
    err_f = float(jnp.max(jnp.abs(out_f - ref_f)))
    assert jnp.allclose(out_f, ref_f, rtol=3e-2, atol=3e-2), err_f

    print("KERNEL_OK")
</pallas_src>

<mosaic_0001>
module attributes {stable_mosaic.version = 11 : i64} {
  func.func @kernel(%arg0: i32, %arg1: memref<1x20x512xbf16, #tpu.memory_space<vmem>>, %arg2: memref<32x100xbf16, #tpu.memory_space<vmem>>, %arg3: memref<3x32x1xf32, #tpu.memory_space<vmem>>, %arg4: memref<1x32x384xbf16, #tpu.memory_space<vmem>>, %arg5: memref<100x384xbf16, #tpu.memory_space<vmem>>) attributes {dimension_semantics = [#tpu.dimension_semantics<parallel>], iteration_bounds = array<i64: 2>, scalar_prefetch = 0 : i64, scratch_operands = 1 : i64, tpu.core_type = #tpu.core_type<tc>, window_params = [{transform_indices = @transform_0, window_bounds = array<i64: 1, 20, 512>}, {pipeline_mode = #tpu.pipeline_mode<synchronous>, transform_indices = @transform_1, window_bounds = array<i64: 32, 100>}, {pipeline_mode = #tpu.pipeline_mode<synchronous>, transform_indices = @transform_2, window_bounds = array<i64: 3, 32, 1>}, {transform_indices = @transform_3, window_bounds = array<i64: 1, 32, 384>}]} {
    %c0 = arith.constant 0 : index
    %c0_0 = arith.constant 0 : index
    %0 = vector.load %arg2[%c0, %c0_0] : memref<32x100xbf16, #tpu.memory_space<vmem>>, vector<32x100xbf16>
    %c0_1 = arith.constant 0 : index
    %c0_2 = arith.constant 0 : index
    %c0_3 = arith.constant 0 : index
    %1 = vector.load %arg3[%c0_1, %c0_2, %c0_3] : memref<3x32x1xf32, #tpu.memory_space<vmem>>, vector<1x32x1xf32>
    %2 = vector.shape_cast %1 : vector<1x32x1xf32> to vector<32x1xf32>
    %c1 = arith.constant 1 : index
    %c0_4 = arith.constant 0 : index
    %c0_5 = arith.constant 0 : index
    %3 = vector.load %arg3[%c1, %c0_4, %c0_5] : memref<3x32x1xf32, #tpu.memory_space<vmem>>, vector<1x32x1xf32>
    %4 = vector.shape_cast %3 : vector<1x32x1xf32> to vector<32x1xf32>
    %c2 = arith.constant 2 : index
    %c0_6 = arith.constant 0 : index
    %c0_7 = arith.constant 0 : index
    %5 = vector.load %arg3[%c2, %c0_6, %c0_7] : memref<3x32x1xf32, #tpu.memory_space<vmem>>, vector<1x32x1xf32>
    %6 = vector.shape_cast %5 : vector<1x32x1xf32> to vector<32x1xf32>
    %c0_8 = arith.constant 0 : index
    %c0_9 = arith.constant 0 : index
    %c0_10 = arith.constant 0 : index
    %7 = vector.load %arg1[%c0_8, %c0_9, %c0_10] : memref<1x20x512xbf16, #tpu.memory_space<vmem>>, vector<1x20x384xbf16>
    %8 = vector.shape_cast %7 : vector<1x20x384xbf16> to vector<20x384xbf16>
    %c0_11 = arith.constant 0 : index
    %c0_12 = arith.constant 0 : index
    %9 = vector.load %arg5[%c0_11, %c0_12] : memref<100x384xbf16, #tpu.memory_space<vmem>>, vector<20x384xbf16>
    tpu.vector_store %arg5[%c0_11, %c0_12], %8 {strides = array<i32>} : memref<100x384xbf16, #tpu.memory_space<vmem>>, vector<20x384xbf16>,
    %c0_13 = arith.constant 0 : index
    %c0_14 = arith.constant 0 : index
    %c1_15 = arith.constant 1 : index
    %10 = vector.load %arg1[%c0_13, %c0_14, %c1_15] : memref<1x20x512xbf16, #tpu.memory_space<vmem>>, vector<1x20x384xbf16>
    %11 = vector.shape_cast %10 : vector<1x20x384xbf16> to vector<20x384xbf16>
    %c20 = arith.constant 20 : index
    %c0_16 = arith.constant 0 : index
    %12 = vector.load %arg5[%c20, %c0_16] : memref<100x384xbf16, #tpu.memory_space<vmem>>, vector<20x384xbf16>
    tpu.vector_store %arg5[%c20, %c0_16], %11 {strides = array<i32>} : memref<100x384xbf16, #tpu.memory_space<vmem>>, vector<20x384xbf16>,
    %c0_17 = arith.constant 0 : index
    %c0_18 = arith.constant 0 : index
    %c2_19 = arith.constant 2 : index
    %13 = vector.load %arg1[%c0_17, %c0_18, %c2_19] : memref<1x20x512xbf16, #tpu.memory_space<vmem>>, vector<1x20x384xbf16>
    %14 = vector.shape_cast %13 : vector<1x20x384xbf16> to vector<20x384xbf16>
    %c40 = arith.constant 40 : index
    %c0_20 = arith.constant 0 : index
    %15 = vector.load %arg5[%c40, %c0_20] : memref<100x384xbf16, #tpu.memory_space<vmem>>, vector<20x384xbf16>
    tpu.vector_store %arg5[%c40, %c0_20], %14 {strides = array<i32>} : memref<100x384xbf16, #tpu.memory_space<vmem>>, vector<20x384xbf16>,
    %c0_21 = arith.constant 0 : index
    %c0_22 = arith.constant 0 : index
    %c3 = arith.constant 3 : index
    %16 = vector.load %arg1[%c0_21, %c0_22, %c3] : memref<1x20x512xbf16, #tpu.memory_space<vmem>>, vector<1x20x384xbf16>
    %17 = vector.shape_cast %16 : vector<1x20x384xbf16> to vector<20x384xbf16>
    %c60 = arith.constant 60 : index
    %c0_23 = arith.constant 0 : index
    %18 = vector.load %arg5[%c60, %c0_23] : memref<100x384xbf16, #tpu.memory_space<vmem>>, vector<20x384xbf16>
    tpu.vector_store %arg5[%c60, %c0_23], %17 {strides = array<i32>} : memref<100x384xbf16, #tpu.memory_space<vmem>>, vector<20x384xbf16>,
    %c0_24 = arith.constant 0 : index
    %c0_25 = arith.constant 0 : index
    %c4 = arith.constant 4 : index
    %19 = vector.load %arg1[%c0_24, %c0_25, %c4] : memref<1x20x512xbf16, #tpu.memory_space<vmem>>, vector<1x20x384xbf16>
    %20 = vector.shape_cast %19 : vector<1x20x384xbf16> to vector<20x384xbf16>
    %c80 = arith.constant 80 : index
    %c0_26 = arith.constant 0 : index
    %21 = vector.load %arg5[%c80, %c0_26] : memref<100x384xbf16, #tpu.memory_space<vmem>>, vector<20x384xbf16>
    tpu.vector_store %arg5[%c80, %c0_26], %20 {strides = array<i32>} : memref<100x384xbf16, #tpu.memory_space<vmem>>, vector<20x384xbf16>,
    %c0_27 = arith.constant 0 : index
    %c0_28 = arith.constant 0 : index
    %22 = vector.load %arg5[%c0_27, %c0_28] : memref<100x384xbf16, #tpu.memory_space<vmem>>, vector<100x384xbf16>
    %cst = arith.constant dense<0.000000e+00> : vector<32x384xf32>
    %23 = tpu.matmul %0, %22, %cst {dimension_numbers = #tpu.dot_dimension_numbers<[1], [0], [0], [1], [0, 0, 1, 1], [], []>} : vector<32x100xbf16>, vector<100x384xbf16>, vector<32x384xf32> -> vector<32x384xf32>
    %24 = vector.broadcast %2 : vector<32x1xf32> to vector<32x384xf32>
    %25 = arith.addf %23, %24 : vector<32x384xf32>
    %cst_29 = arith.constant 0.000000e+00 : f32
    %26 = vector.broadcast %cst_29 : f32 to vector<32x384xf32>
    %27 = arith.maximumf %25, %26 : vector<32x384xf32>
    %28 = vector.broadcast %4 : vector<32x1xf32> to vector<32x384xf32>
    %29 = arith.mulf %27, %28 : vector<32x384xf32>
    %30 = vector.broadcast %6 : vector<32x1xf32> to vector<32x384xf32>
    %31 = arith.addf %29, %30 : vector<32x384xf32>
    %32 = arith.truncf %31 : vector<32x384xf32> to vector<32x384xbf16>
    %c0_30 = arith.constant 0 : index
    %c0_31 = arith.constant 0 : index
    %c0_32 = arith.constant 0 : index
    %33 = vector.load %arg4[%c0_30, %c0_31, %c0_32] : memref<1x32x384xbf16, #tpu.memory_space<vmem>>, vector<1x32x384xbf16>
    %34 = vector.shape_cast %33 : vector<1x32x384xbf16> to vector<32x384xbf16>
    %35 = vector.shape_cast %32 : vector<32x384xbf16> to vector<1x32x384xbf16>
    tpu.vector_store %arg4[%c0_30, %c0_31, %c0_32], %35 {strides = array<i32>} : memref<1x32x384xbf16, #tpu.memory_space<vmem>>, vector<1x32x384xbf16>,
    return
  }
  func.func @transform_0(%arg0: i32) -> (i32, i32, i32) {
    %c0_i32 = arith.constant 0 : i32
    %c0_i32_0 = arith.constant 0 : i32
    %c0_i32_1 = arith.constant 0 : i32
    return %arg0, %c0_i32, %c0_i32_0 : i32, i32, i32
  }
  func.func @transform_1(%arg0: i32) -> (i32, i32) {
    %c0_i32 = arith.constant 0 : i32
    %c0_i32_0 = arith.constant 0 : i32
    %c0_i32_1 = arith.constant 0 : i32
    return %c0_i32, %c0_i32_0 : i32, i32
  }
  func.func @transform_2(%arg0: i32) -> (i32, i32, i32) {
    %c0_i32 = arith.constant 0 : i32
    %c0_i32_0 = arith.constant 0 : i32
    %c0_i32_1 = arith.constant 0 : i32
    %c0_i32_2 = arith.constant 0 : i32
    return %c0_i32, %c0_i32_0, %c0_i32_1 : i32, i32, i32
  }
  func.func @transform_3(%arg0: i32) -> (i32, i32, i32) {
    %c0_i32 = arith.constant 0 : i32
    %c0_i32_0 = arith.constant 0 : i32
    %c0_i32_1 = arith.constant 0 : i32
    return %arg0, %c0_i32, %c0_i32_0 : i32, i32, i32
  }
}

</mosaic_0001>

<llo_original>
// kernel: tpu_custom_call.1
$region0: #{tpu_custom_call.1}
  #allocation0 [shape = 'u32[]', space=smem, size = 0x4, offset = 0x4, fixed_abs, tag = 'smem constant byte address 0x4 - core index']
  #allocation1 [shape = 'u32[144,128]{1,0:T(1,128)}', space=vmem, size = 0x12000, scoped, tag = 'internal scratch']
  #allocation2 [shape = 'bf16[100,384]{1,0:T(8,128)(2,1)}', space=vmem, size = 0x13800, scoped, tag = 'scratch operand']
  %s0 = inlined_call_operand.vmem [shape: bf16[2,20,512], index: 0, kind: input, shape index: {}]
  %s1 = inlined_call_operand.vmem [shape: bf16[32,100], index: 1, kind: input, shape index: {}]
  %s2 = inlined_call_operand.vmem [shape: f32[3,32,1], index: 2, kind: input, shape index: {}]
  %s3 = inlined_call_operand.hbm [shape: bf16[2,32,384], index: 3, kind: output, shape index: {}]
  %s4 = sld [smem:[#allocation0]]
  $region45: #{tpu_custom_call.1} parent=0
    _
  %s6 = ssub.s32 1, %s4
  %s7 = scalar_select 0, %s6, %s4
  $region1: #{tpu_custom_call.1} parent=0
    #allocation3 [shape = 'u8[49152]{0}', space=vmem, size = 0xc000, scoped, tag = 'output window, operand 0']
    #allocation4 [shape = 's32[2]{0}', space=sflag, size = 0x8, scoped, tag = 'scoped memory for tpu_custom_call.1']
    %8 = vsyncpa [#allocation4], 0
    %s9 = scalar_lea.sflag [#allocation4], 1
    %10 = vsyncpa %s9, 0
    loop: start=0, step=1, limit=4
    $region2: #{tpu_custom_call.1} parent=1 // loop_pre_header
      _
    $region3: #{tpu_custom_call.1} parent=1 // loop_header
      %s12 = sphi 0, %s16
      %p13 = scmp.ge.s32.totalorder %s12, 4
      %s22 = sphi 0, %s24
      %s25 = sphi 0, %s22
      %s26 = sphi 0, %s25
      %s42 = sphi 0, %s26
      %s46 = sphi 0, %s46
      %s48 = sphi 0, %s46
      %s49 = sphi 0, %s48
      %s63 = sphi 0, %s49
      %s67 = sphi 0, %s67
      %s69 = sphi 0, %s67
      %s70 = sphi 0, %s69
      %s84 = sphi 0, %s70
      %s90 = sphi 0, %s92
      %s93 = sphi 0, %s90
      %s94 = sphi 0, %s93
      %s110 = sphi 0, %s94
    $region4: #{tpu_custom_call.1} parent=1 // loop_header_branch
      %15 = sbr.rel (%p13) target = $region8
    $region5: #{tpu_custom_call.1} parent=1 // loop_body
      %s17 = ssub.s32 %s12, 1
      %s18 = ssub.s32 %s12, 2
      %s19 = sadd.s32 %s12, 1
      %s20 = ssub.s32 %s12, %s19
      %p21 = scmp.eq.s32.totalorder %s20, 0
      %s23 = sadd.s32 %s22, 1
      %s24 = scalar_select %p21, %s22, %s23
      %p27 = pneg %p21
      %p28 = scmp.eq.s32.totalorder %s12, 1
      %p29 = por %p27, %p28
      %p30 = scmp.ne.s32.totalorder %s22, %s25
      %p31 = scmp.eq.s32.totalorder %s12, 0
      %p32 = por %p30, %p31
      %p33 = scmp.ne.s32.totalorder %s22, %s25
      %p34 = scmp.eq.s32.totalorder %s17, 1
      %p35 = por %p33, %p34
      %p36 = scmp.ne.s32.totalorder %s25, %s26
      %p37 = scmp.eq.s32.totalorder %s17, 0
      %p38 = por %p36, %p37
      %p39 = scmp.ne.s32.totalorder %s25, %s26
      %p40 = scmp.eq.s32.totalorder %s18, 1
      %p41 = por %p39, %p40
      %p43 = scmp.ne.s32.totalorder %s26, %s42
      %p44 = scmp.eq.s32.totalorder %s18, 0
      %p45 = por %p43, %p44
      %s47 = sadd.s32 %s46, 1
      %p50 = scmp.eq.s32.totalorder %s12, 1
      %p51 = scmp.ne.s32.totalorder %s46, %s48
      %p52 = scmp.eq.s32.totalorder %s12, 0
      %p53 = por %p51, %p52
      %p54 = scmp.ne.s32.totalorder %s46, %s48
      %p55 = scmp.eq.s32.totalorder %s17, 1
      %p56 = por %p54, %p55
      %p57 = scmp.ne.s32.totalorder %s48, %s49
      %p58 = scmp.eq.s32.totalorder %s17, 0
      %p59 = por %p57, %p58
      %p60 = scmp.ne.s32.totalorder %s48, %s49
      %p61 = scmp.eq.s32.totalorder %s18, 1
      %p62 = por %p60, %p61
      %p64 = scmp.ne.s32.totalorder %s49, %s63
      %p65 = scmp.eq.s32.totalorder %s18, 0
      %p66 = por %p64, %p65
      %s68 = sadd.s32 %s67, 1
      %p71 = scmp.eq.s32.totalorder %s12, 1
      %p72 = scmp.ne.s32.totalorder %s67, %s69
      %p73 = scmp.eq.s32.totalorder %s12, 0
      %p74 = por %p72, %p73
      %p75 = scmp.ne.s32.totalorder %s67, %s69
      %p76 = scmp.eq.s32.totalorder %s17, 1
      %p77 = por %p75, %p76
      %p78 = scmp.ne.s32.totalorder %s69, %s70
      %p79 = scmp.eq.s32.totalorder %s17, 0
      %p80 = por %p78, %p79
      %p81 = scmp.ne.s32.totalorder %s69, %s70
      %p82 = scmp.eq.s32.totalorder %s18, 1
      %p83 = por %p81, %p82
      %p85 = scmp.ne.s32.totalorder %s70, %s84
      %p86 = scmp.eq.s32.totalorder %s18, 0
      %p87 = por %p85, %p86
      %s88 = ssub.s32 %s12, %s19
      %p89 = scmp.eq.s32.totalorder %s88, 0
      %s91 = sadd.s32 %s90, 1
      %s92 = scalar_select %p89, %s90, %s91
      %p95 = pneg %p89
      %p96 = scmp.eq.s32.totalorder %s12, 1
      %p97 = por %p95, %p96
      %p98 = scmp.ne.s32.totalorder %s90, %s93
      %p99 = scmp.eq.s32.totalorder %s12, 0
      %p100 = por %p98, %p99
      %p101 = scmp.ne.s32.totalorder %s90, %s93
      %p102 = scmp.eq.s32.totalorder %s17, 1
      %p103 = por %p101, %p102
      %p104 = scmp.ne.s32.totalorder %s93, %s94
      %p105 = scmp.eq.s32.totalorder %s17, 0
      %p106 = por %p104, %p105
      %p107 = scmp.ne.s32.totalorder %s93, %s94
      %p108 = scmp.eq.s32.totalorder %s18, 1
      %p109 = por %p107, %p108
      %p111 = scmp.ne.s32.totalorder %s94, %s110
      %p112 = scmp.eq.s32.totalorder %s18, 0
      %p113 = por %p111, %p112
      %p114 = scmp.le.s32.totalorder 1, %s12
      %p115 = scmp.lt.s32.totalorder %s12, 3
      %p116 = pnand %p114, %p115
      %p117 = pneg %p116
      // Predicated region
      $region9: #{tpu_custom_call.1} parent=5 // pred_check
        _
      $region10: #{tpu_custom_call.1} parent=5 // pred_check_branch
        %119 = sbr.rel (%p116) target = $region12
      $region11: #{tpu_custom_call.1} parent=5 // pred_region
        %s120 = ssub.s32 %s12, 1
        // Predicated region
        $region13: #{tpu_custom_call.1} parent=11 // pred_check
          %p121 = pneg %p59
        $region14: #{tpu_custom_call.1} parent=11 // pred_check_branch
          %123 = sbr.rel (%p121) target = $region16
        $region15: #{tpu_custom_call.1} parent=11 // pred_region
          _
        $region16: #{tpu_custom_call.1} parent=11 // pred_fallthru
          _
        // Predicated region
        $region17: #{tpu_custom_call.1} parent=11 // pred_check
          %p124 = pneg %p80
        $region18: #{tpu_custom_call.1} parent=11 // pred_check_branch
          %126 = sbr.rel (%p124) target = $region20
        $region19: #{tpu_custom_call.1} parent=11 // pred_region
          _
        $region20: #{tpu_custom_call.1} parent=11 // pred_fallthru
          _
      $region12: #{tpu_custom_call.1} parent=5 // pred_fallthru
        _
      %p127 = scmp.lt.s32.totalorder %s12, 2
      // Predicated region
      $region21: #{tpu_custom_call.1} parent=5 // pred_check
        %p128 = pneg %p127
      $region22: #{tpu_custom_call.1} parent=5 // pred_check_branch
        %130 = sbr.rel (%p128) target = $region24
      $region23: #{tpu_custom_call.1} parent=5 // pred_region
        // Predicated region
        $region25: #{tpu_custom_call.1} parent=23 // pred_check
          %p131 = pneg %p32
        $region26: #{tpu_custom_call.1} parent=23 // pred_check_branch
          %133 = sbr.rel (%p131) target = $region28
        $region27: #{tpu_custom_call.1} parent=23 // pred_region
          %p134 = scmp.lt.s32.totalorder %s12, 1
          %s135 = scalar_select %p134, %s12, 1
          %s136 = smul.addr %s135, 12
          %s137 = smul.addr %s136, 4
          %s138 = scalar_lea.vmem %s0, %s137
        $region28: #{tpu_custom_call.1} parent=23 // pred_fallthru
          _
      $region24: #{tpu_custom_call.1} parent=5 // pred_fallthru
        _
      %p139 = scmp.le.s32.totalorder 1, %s12
      %p140 = scmp.lt.s32.totalorder %s12, 3
      %p141 = pnand %p139, %p140
      %p142 = pneg %p141
      // Predicated region
      $region29: #{tpu_custom_call.1} parent=5 // pred_check
        _
      $region30: #{tpu_custom_call.1} parent=5 // pred_check_branch
        %144 = sbr.rel (%p141) target = $region32
      $region31: #{tpu_custom_call.1} parent=5 // pred_region
        %s145 = ssub.s32 %s12, 1
        %p146 = scmp.lt.s32.totalorder %s17, 1
        %s147 = scalar_select %p146, %s17, 1
        %s148 = smul.addr %s147, 12
        %s149 = smul.addr %s148, 4
        %s150 = scalar_lea.vmem %s0, %s149
        %p151 = pneg %p38
        %p152 = pneg %p35
        %p153 = pneg %p59
        %p154 = pneg %p56
        %p155 = pneg %p80
        %p156 = pneg %p77
        %p157 = pneg %p106
        %p158 = pneg %p103
        %s159 = sand.u32 %s93, 1
        %s160 = scalar_lea.sflag [#allocation4], %s159
        %s161 = sand.u32 %s93, 1
        %s162 = smul.addr %s161, 48
        %s163 = scalar_lea.vmem [#allocation3], %s162
        %p164 = scmp.lt.s32.totalorder %s17, 1
        %s165 = scalar_select %p164, %s17, 1
        %s166 = smul.addr %s165, 12
        %s167 = smul.addr %s166, 4
        %s168 = scalar_lea.vmem %s0, %s167
        %v170 = vld [vmem:[%s1] sm:$0xf]
        %v171 = vld [vmem:[%s1 + $0x4] sm:$0xf]
        %v172 = vld [vmem:[%s1 + $0x8] sm:$0xf]
        %v173 = vld [vmem:[%s1 + $0xc] sm:$0xf]
        %v174 = vld [vmem:[%s2] sm:$0xff]
        %v175 = vld [vmem:[%s2 + $0x8] sm:$0xff]
        %v176 = vld [vmem:[%s2 + $0x10] sm:$0xff]
        %v177 = vld [vmem:[%s2 + $0x18] sm:$0xff]
        %s178 = scalar_lea.vmem %s2, 32
        %v179 = vld [vmem:[%s178] sm:$0xff]
        %v180 = vld [vmem:[%s178 + $0x8] sm:$0xff]
        %v181 = vld [vmem:[%s178 + $0x10] sm:$0xff]
        %v182 = vld [vmem:[%s178 + $0x18] sm:$0xff]
        %s183 = scalar_lea.vmem %s2, 64
        %v184 = vld [vmem:[%s183] sm:$0xff]
        %v185 = vld [vmem:[%s183 + $0x8] sm:$0xff]
        %v186 = vld [vmem:[%s183 + $0x10] sm:$0xff]
        %v187 = vld [vmem:[%s183 + $0x18] sm:$0xff]
        %v188 = vld [vmem:[%s168] sm:$0xff]
        %v189 = vld [vmem:[%s168 + $0x8] sm:$0xf]
        %v190 = vld [vmem:[%s168 + $0x10] sm:$0xff]
        %v191 = vld [vmem:[%s168 + $0x18] sm:$0xf]
        %v192 = vld [vmem:[%s168 + $0x20] sm:$0x33]
        %v193 = vld [vmem:[%s168 + $0x28] sm:$0x3]
        %194 = vst [vmem:[#allocation2] sm:$0xff] %v188
        %195 = vst [vmem:[#allocation2 + $0x8] sm:$0xf] %v189
        %196 = vst [vmem:[#allocation2 + $0xc] sm:$0xff] %v190
        %197 = vst [vmem:[#allocation2 + $0x14] sm:$0xf] %v191
        %198 = vst [vmem:[#allocation2 + $0x18] sm:$0x33] %v192
        %199 = vst [vmem:[#allocation2 + $0x20] sm:$0x3] %v193
        %v200 = vld [vmem:[%s168] sm:$0xff]
        %v201 = vld [vmem:[%s168 + $0x8] sm:$0xff]
        %v202 = vld [vmem:[%s168 + $0x10] sm:$0xff]
        %v203 = vld [vmem:[%s168 + $0x18] sm:$0xff]
        %v204 = vld [vmem:[%s168 + $0x20] sm:$0x33]
        %v205 = vld [vmem:[%s168 + $0x28] sm:$0x33]
        %vm212 = vcmask 1041408
        %vm213 = vcmask 1045508
        %vm214 = vmor %vm212, %vm213
        %v215 = vrot.slane %v200, 6
        %v216 = vrot.slane %v201, 6
        %v217 = vrot.slane %v215, 4
        %v218 = vrot.slane %v202, 6
        %v219 = vsel %vm214, %v217, %v218
        %v220 = vrot.slane %v216, 4
        %v221 = vrot.slane %v203, 6
        %v222 = vsel %vm214, %v220, %v221
        %v223 = vrot.slane %v218, 4
        %v224 = vrot.slane %v204, 6
        %v225 = vsel %vm214, %v223, %v224
        %v226 = vrot.slane %v221, 4
        %v227 = vrot.slane %v205, 6
        %v228 = vsel %vm214, %v226, %v227
        %229 = vrot.lane.b32.xlu0 %v215, 127
        %v230 = vpop.permute.xlu0 %229
        %231 = vrot.lane.b32.xlu0 %v216, 127
        %v232 = vpop.permute.xlu0 %231
        %233 = vrot.lane.b32.xlu0 %v219, 127
        %v234 = vpop.permute.xlu0 %233
        %235 = vrot.lane.b32.xlu0 %v222, 127
        %v236 = vpop.permute.xlu0 %235
        %237 = vrot.lane.b32.xlu0 %v225, 127
        %v238 = vpop.permute.xlu0 %237
        %239 = vrot.lane.b32.xlu0 %v228, 127
        %v240 = vpop.permute.xlu0 %239
        %v241 = vrot.slane %v230, 4
        %v242 = vrot.slane %v232, 4
        %v243 = vrot.slane %v234, 4
        %v244 = vrot.slane %v236, 4
        %v245 = vrot.slane %v238, 4
        %v246 = vrot.slane %v240, 4
        %vm247 = vcmask 1043456
        %v248 = vsel %vm247, %v241, %v242
        %vm249 = vcmask 1039360
        %v250 = vsel %vm249, %v230, %v248
        %v251 = vsel %vm249, %v232, %v242
        %v252 = vsel %vm247, %v243, %v244
        %v253 = vsel %vm249, %v234, %v252
        %v254 = vsel %vm249, %v236, %v244
        %v255 = vsel %vm247, %v245, %v246
        %v256 = vsel %vm249, %v238, %v255
        %v257 = vsel %vm249, %v240, %v246
        %264 = vst [vmem:[#allocation2 + $0x18] sm:$0xcc] %v250
        %265 = vst [vmem:[#allocation2 + $0x20] sm:$0xc] %v251
        %266 = vst [vmem:[#allocation2 + $0x24] sm:$0xff] %v253
        %267 = vst [vmem:[#allocation2 + $0x2c] sm:$0xf] %v254
        %268 = vst [vmem:[#allocation2 + $0x30] sm:$0xff] %v256
        %269 = vst [vmem:[#allocation2 + $0x38] sm:$0xf] %v257
        %v270 = vld [vmem:[%s168] sm:$0xff]
        %v271 = vld [vmem:[%s168 + $0x8] sm:$0xff]
        %v272 = vld [vmem:[%s168 + $0x10] sm:$0xff]
        %v273 = vld [vmem:[%s168 + $0x18] sm:$0xff]
        %v274 = vld [vmem:[%s168 + $0x20] sm:$0x33]
        %v275 = vld [vmem:[%s168 + $0x28] sm:$0x33]
        %282 = vrot.lane.b32.xlu0 %v270, 126
        %v283 = vpop.permute.xlu0 %282
        %284 = vrot.lane.b32.xlu0 %v271, 126
        %v285 = vpop.permute.xlu0 %284
        %286 = vrot.lane.b32.xlu0 %v272, 126
        %v287 = vpop.permute.xlu0 %286
        %288 = vrot.lane.b32.xlu0 %v273, 126
        %v289 = vpop.permute.xlu0 %288
        %290 = vrot.lane.b32.xlu0 %v274, 126
        %v291 = vpop.permute.xlu0 %290
        %292 = vrot.lane.b32.xlu0 %v275, 126
        %v293 = vpop.permute.xlu0 %292
        %v294 = vrot.slane %v283, 4
        %v295 = vrot.slane %v285, 4
        %v296 = vrot.slane %v287, 4
        %v297 = vrot.slane %v289, 4
        %v298 = vrot.slane %v291, 4
        %v299 = vrot.slane %v293, 4
        %v300 = vsel %vm247, %v294, %v295
        %vm301 = vcmask 1031168
        %v302 = vsel %vm301, %v283, %v300
        %v303 = vsel %vm301, %v285, %v295
        %v304 = vsel %vm247, %v296, %v297
        %v305 = vsel %vm301, %v287, %v304
        %v306 = vsel %vm301, %v289, %v297
        %v307 = vsel %vm247, %v298, %v299
        %v308 = vsel %vm301, %v291, %v307
        %v309 = vsel %vm301, %v293, %v299
        %316 = vst [vmem:[#allocation2 + $0x3c] sm:$0xff] %v302
        %317 = vst [vmem:[#allocation2 + $0x44] sm:$0xf] %v303
        %318 = vst [vmem:[#allocation2 + $0x48] sm:$0xff] %v305
        %319 = vst [vmem:[#allocation2 + $0x50] sm:$0xf] %v306
        %320 = vst [vmem:[#allocation2 + $0x54] sm:$0x33] %v308
        %321 = vst [vmem:[#allocation2 + $0x5c] sm:$0x3] %v309
        %v322 = vld [vmem:[%s168] sm:$0xff]
        %v323 = vld [vmem:[%s168 + $0x8] sm:$0xff]
        %v324 = vld [vmem:[%s168 + $0x10] sm:$0xff]
        %v325 = vld [vmem:[%s168 + $0x18] sm:$0xff]
        %v326 = vld [vmem:[%s168 + $0x20] sm:$0x33]
        %v327 = vld [vmem:[%s168 + $0x28] sm:$0x33]
        %v334 = vrot.slane %v322, 6
        %v335 = vrot.slane %v323, 6
        %v336 = vrot.slane %v334, 4
        %v337 = vrot.slane %v324, 6
        %v338 = vsel %vm214, %v336, %v337
        %v339 = vrot.slane %v335, 4
        %v340 = vrot.slane %v325, 6
        %v341 = vsel %vm214, %v339, %v340
        %v342 = vrot.slane %v337, 4
        %v343 = vrot.slane %v326, 6
        %v344 = vsel %vm214, %v342, %v343
        %v345 = vrot.slane %v340, 4
        %v346 = vrot.slane %v327, 6
        %v347 = vsel %vm214, %v345, %v346
        %348 = vrot.lane.b32.xlu0 %v334, 125
        %v349 = vpop.permute.xlu0 %348
        %350 = vrot.lane.b32.xlu0 %v335, 125
        %v351 = vpop.permute.xlu0 %350
        %352 = vrot.lane.b32.xlu0 %v338, 125
        %v353 = vpop.permute.xlu0 %352
        %354 = vrot.lane.b32.xlu0 %v341, 125
        %v355 = vpop.permute.xlu0 %354
        %356 = vrot.lane.b32.xlu0 %v344, 125
        %v357 = vpop.permute.xlu0 %356
        %358 = vrot.lane.b32.xlu0 %v347, 125
        %v359 = vpop.permute.xlu0 %358
        %v360 = vrot.slane %v349, 4
        %v361 = vrot.slane %v351, 4
        %v362 = vrot.slane %v353, 4
        %v363 = vrot.slane %v355, 4
        %v364 = vrot.slane %v357, 4
        %v365 = vrot.slane %v359, 4
        %v366 = vsel %vm247, %v360, %v361
        %vm367 = vcmask 1022976
        %v368 = vsel %vm367, %v349, %v366
        %v369 = vsel %vm367, %v351, %v361
        %v370 = vsel %vm247, %v362, %v363
        %v371 = vsel %vm367, %v353, %v370
        %v372 = vsel %vm367, %v355, %v363
        %v373 = vsel %vm247, %v364, %v365
        %v374 = vsel %vm367, %v357, %v373
        %v375 = vsel %vm367, %v359, %v365
        %382 = vst [vmem:[#allocation2 + $0x54] sm:$0xcc] %v368
        %383 = vst [vmem:[#allocation2 + $0x5c] sm:$0xc] %v369
        %384 = vst [vmem:[#allocation2 + $0x60] sm:$0xff] %v371
        %385 = vst [vmem:[#allocation2 + $0x68] sm:$0xf] %v372
        %386 = vst [vmem:[#allocation2 + $0x6c] sm:$0xff] %v374
        %387 = vst [vmem:[#allocation2 + $0x74] sm:$0xf] %v375
        %v388 = vld [vmem:[%s168] sm:$0xff]
        %v389 = vld [vmem:[%s168 + $0x8] sm:$0xff]
        %v390 = vld [vmem:[%s168 + $0x10] sm:$0xff]
        %v391 = vld [vmem:[%s168 + $0x18] sm:$0xff]
        %v392 = vld [vmem:[%s168 + $0x20] sm:$0x33]
        %v393 = vld [vmem:[%s168 + $0x28] sm:$0x33]
        %400 = vrot.lane.b32.xlu0 %v388, 124
        %v401 = vpop.permute.xlu0 %400
        %402 = vrot.lane.b32.xlu0 %v389, 124
        %v403 = vpop.permute.xlu0 %402
        %404 = vrot.lane.b32.xlu0 %v390, 124
        %v405 = vpop.permute.xlu0 %404
        %406 = vrot.lane.b32.xlu0 %v391, 124
        %v407 = vpop.permute.xlu0 %406
        %408 = vrot.lane.b32.xlu0 %v392, 124
        %v409 = vpop.permute.xlu0 %408
        %410 = vrot.lane.b32.xlu0 %v393, 124
        %v411 = vpop.permute.xlu0 %410
        %v412 = vrot.slane %v401, 4
        %v413 = vrot.slane %v403, 4
        %v414 = vrot.slane %v405, 4
        %v415 = vrot.slane %v407, 4
        %v416 = vrot.slane %v409, 4
        %v417 = vrot.slane %v411, 4
        %v418 = vsel %vm247, %v412, %v413
        %vm419 = vcmask 1014784
        %v420 = vsel %vm419, %v401, %v418
        %v421 = vsel %vm419, %v403, %v413
        %v422 = vsel %vm247, %v414, %v415
        %v423 = vsel %vm419, %v405, %v422
        %v424 = vsel %vm419, %v407, %v415
        %v425 = vsel %vm247, %v416, %v417
        %v426 = vsel %vm419, %v409, %v425
        %v427 = vsel %vm419, %v411, %v417
        %434 = vst [vmem:[#allocation2 + $0x78] sm:$0xff] %v420
        %435 = vst [vmem:[#allocation2 + $0x80] sm:$0xf] %v421
        %436 = vst [vmem:[#allocation2 + $0x84] sm:$0xff] %v423
        %437 = vst [vmem:[#allocation2 + $0x8c] sm:$0xf] %v424
        %438 = vst [vmem:[#allocation2 + $0x90] sm:$0x33] %v426
        %439 = vst [vmem:[#allocation2 + $0x98] sm:$0x3] %v427
        %v440 = vld [vmem:[#allocation2] sm:$0xff]
        %v441 = vld [vmem:[#allocation2 + $0x8] sm:$0xf]
        %v442 = vld [vmem:[#allocation2 + $0xc] sm:$0xff]
        %v443 = vld [vmem:[#allocation2 + $0x14] sm:$0xf]
        %v444 = vld [vmem:[#allocation2 + $0x18] sm:$0xff]
        %v445 = vld [vmem:[#allocation2 + $0x20] sm:$0xf]
        %v446 = vld [vmem:[#allocation2 + $0x24] sm:$0xff]
        %v447 = vld [vmem:[#allocation2 + $0x2c] sm:$0xf]
        %v448 = vld [vmem:[#allocation2 + $0x30] sm:$0xff]
        %v449 = vld [vmem:[#allocation2 + $0x38] sm:$0xf]
        %v450 = vld [vmem:[#allocation2 + $0x3c] sm:$0xff]
        %v451 = vld [vmem:[#allocation2 + $0x44] sm:$0xf]
        %v452 = vld [vmem:[#allocation2 + $0x48] sm:$0xff]
        %v453 = vld [vmem:[#allocation2 + $0x50] sm:$0xf]
        %v454 = vld [vmem:[#allocation2 + $0x54] sm:$0xff]
        %v455 = vld [vmem:[#allocation2 + $0x5c] sm:$0xf]
        %v456 = vld [vmem:[#allocation2 + $0x60] sm:$0xff]
        %v457 = vld [vmem:[#allocation2 + $0x68] sm:$0xf]
        %v458 = vld [vmem:[#allocation2 + $0x6c] sm:$0xff]
        %v459 = vld [vmem:[#allocation2 + $0x74] sm:$0xf]
        %v460 = vld [vmem:[#allocation2 + $0x78] sm:$0xff]
        %v461 = vld [vmem:[#allocation2 + $0x80] sm:$0xf]
        %v462 = vld [vmem:[#allocation2 + $0x84] sm:$0xff]
        %v463 = vld [vmem:[#allocation2 + $0x8c] sm:$0xf]
        %v464 = vld [vmem:[#allocation2 + $0x90] sm:$0x33]
        %v465 = vld [vmem:[#allocation2 + $0x98] sm:$0x3]
        %467 = vset.pattern.permute.xlu0 0
        %468 = vperm.xlu0 %467, %v174
        %v469 = vpop.permute.xlu0 %468
        %472 = vset.pattern.permute.xlu0 0
        %473 = vperm.xlu0 %472, %v175
        %v474 = vpop.permute.xlu0 %473
        %477 = vset.pattern.permute.xlu0 0
        %478 = vperm.xlu0 %477, %v176
        %v479 = vpop.permute.xlu0 %478
        %482 = vset.pattern.permute.xlu0 0
        %483 = vperm.xlu0 %482, %v177
        %v484 = vpop.permute.xlu0 %483
        %v490 = vunpack.c.l.b16 %v170
        %v491 = vunpack.c.l.b16 %v171
        %v492 = vunpack.c.l.b16 %v172
        %v493 = vunpack.c.l.b16 %v173
        %v494 = vpack.c.b16 %v491, %v490
        %v495 = vpack.c.b16 %v493, %v492
        %v522 = vunpack.c.l.b16 %v440
        %v523 = vunpack.c.h.b16 %v440
        %v524 = vunpack.c.l.b16 %v441
        %v525 = vunpack.c.l.b16 %v442
        %v526 = vunpack.c.h.b16 %v442
        %v527 = vunpack.c.l.b16 %v443
        %v528 = vunpack.c.l.b16 %v444
        %v529 = vunpack.c.h.b16 %v444
        %v530 = vunpack.c.l.b16 %v445
        %v531 = vunpack.c.l.b16 %v446
        %v532 = vunpack.c.h.b16 %v446
        %v533 = vunpack.c.l.b16 %v447
        %v534 = vunpack.c.l.b16 %v448
        %v535 = vunpack.c.h.b16 %v448
        %v536 = vunpack.c.l.b16 %v449
        %v537 = vunpack.c.l.b16 %v450
        %v538 = vunpack.c.h.b16 %v450
        %v539 = vunpack.c.l.b16 %v451
        %v540 = vunpack.c.l.b16 %v452
        %v541 = vunpack.c.h.b16 %v452
        %v542 = vunpack.c.l.b16 %v453
        %v543 = vunpack.c.l.b16 %v454
        %v544 = vunpack.c.h.b16 %v454
        %v545 = vunpack.c.l.b16 %v455
        %v546 = vunpack.c.l.b16 %v456
        %v547 = vunpack.c.h.b16 %v456
        %v548 = vunpack.c.l.b16 %v457
        %v549 = vunpack.c.l.b16 %v458
        %v550 = vunpack.c.h.b16 %v458
        %v551 = vunpack.c.l.b16 %v459
        %v552 = vunpack.c.l.b16 %v460
        %v553 = vunpack.c.h.b16 %v460
        %v554 = vunpack.c.l.b16 %v461
        %v555 = vunpack.c.l.b16 %v462
        %v556 = vunpack.c.h.b16 %v462
        %v557 = vunpack.c.l.b16 %v463
        %v558 = vunpack.c.l.b16 %v464
        %v559 = vunpack.c.h.b16 %v464
        %v560 = vunpack.c.l.b16 %v465
        %v561 = vpack.c.b16 %v525, %v522
        %v562 = vpack.c.b16 %v526, %v523
        %v563 = vpack.c.b16 %v527, %v524
        %v564 = vpack.c.b16 %v531, %v528
        %v565 = vpack.c.b16 %v532, %v529
        %v566 = vpack.c.b16 %v533, %v530
        %v567 = vpack.c.b16 %v537, %v534
        %v568 = vpack.c.b16 %v538, %v535
        %v569 = vpack.c.b16 %v539, %v536
        %v570 = vpack.c.b16 %v543, %v540
        %v571 = vpack.c.b16 %v544, %v541
        %v572 = vpack.c.b16 %v545, %v542
        %v573 = vpack.c.b16 %v549, %v546
        %v574 = vpack.c.b16 %v550, %v547
        %v575 = vpack.c.b16 %v551, %v548
        %v576 = vpack.c.b16 %v555, %v552
        %v577 = vpack.c.b16 %v556, %v553
        %v578 = vpack.c.b16 %v557, %v554
        %v579 = vpack.c.b16 %v558, %v558
        %v580 = vpack.c.b16 %v559, %v559
        %v581 = vpack.c.b16 %v560, %v560
        %vm600 = vcmask 818176
        %v602 = vsel %vm600, %v494, 0
        %v605 = vsel %vm600, %v495, 0
        %vm607 = vcmask 1041408
        %v609 = vsel %vm607, %v579, 0
        %v612 = vsel %vm607, %v580, 0
        %v615 = vsel %vm607, %v581, 0
        %617 = vmatprep.subr.bf16.mxu0 0
        %618 = vmatpush1.bf16.msra.mxu0 0
        %619 = vmatprep.subr.bf16.mxu0 %v612
        %620 = vmatpush1.bf16.msra.mxu0 %v609
        %621 = vmatprep.subr.bf16.mxu0 %v577
        %622 = vmatpush1.bf16.msra.mxu0 %v576
        %623 = vmatprep.subr.bf16.mxu0 %v574
        %624 = vmatpush1.bf16.msra.mxu0 %v573
        %625 = vmatprep.subr.bf16.mxu0 %v571
        %626 = vmatpush1.bf16.msra.mxu0 %v570
        %627 = vmatprep.subr.bf16.mxu0 %v568
        %628 = vmatpush1.bf16.msra.mxu0 %v567
        %629 = vmatprep.subr.bf16.mxu0 %v565
        %630 = vmatpush1.bf16.msra.mxu0 %v564
        %631 = vmatprep.subr.bf16.mxu0 %v562
        %632 = vmatpush1.bf16.msra.mxu0 %v561
        %633 = vmatprep.subr.bf16.mxu0 0
        %634 = vmatpush2.bf16.msra.mxu0 0
        %635 = vmatprep.subr.bf16.mxu0 0
        %636 = vmatpush2.bf16.msra.mxu0 0
        %637 = vmatprep.subr.bf16.mxu0 0
        %638 = vmatpush2.bf16.msra.mxu0 0
        %639 = vmatprep.subr.bf16.mxu0 0
        %640 = vmatpush2.bf16.msra.mxu0 0
        %641 = vmatprep.subr.bf16.mxu0 0
        %642 = vmatpush2.bf16.msra.mxu0 0
        %643 = vmatprep.subr.bf16.mxu0 0
        %644 = vmatpush2.bf16.msra.mxu0 0
        %645 = vmatprep.subr.bf16.mxu0 0
        %646 = vmatpush2.bf16.msra.mxu0 0
        %647 = vmatprep.subr.bf16.mxu0 0
        %648 = vmatpush2.bf16.msra.mxu0 0
        %649 = vmatprep.mubr.bf16.mxu0 0
        %650 = vmatmul.mubr.bf16.gmra.mxu0 %v602
        %v651 = vpop.f32.mrf.mxu0
        %v652 = vadd.f32 %v469, %v651
        %v653 = vpop.f32.mrf.mxu0
        %v654 = vadd.f32 %v469, %v653
        %v655 = vpop.f32.mrf.mxu0
        %v656 = vadd.f32 %v474, %v655
        %v657 = vpop.f32.mrf.mxu0
        %v658 = vadd.f32 %v474, %v657
        %659 = vmatprep.mubr.bf16.mxu0 0
        %660 = vmatmul.mubr.bf16.gmra.mxu0 %v605
        %v661 = vpop.f32.mrf.mxu0
        %v662 = vadd.f32 %v479, %v661
        %v663 = vpop.f32.mrf.mxu0
        %v664 = vadd.f32 %v479, %v663
        %v665 = vpop.f32.mrf.mxu0
        %v666 = vadd.f32 %v484, %v665
        %v667 = vpop.f32.mrf.mxu0
        %v668 = vadd.f32 %v484, %v667
        %669 = vdwg.mxu0
        %670 = vmatprep.subr.bf16.mxu0 0
        %671 = vmatpush1.bf16.msra.mxu0 0
        %672 = vmatprep.subr.bf16.mxu0 0
        %673 = vmatpush1.bf16.msra.mxu0 %v615
        %674 = vmatprep.subr.bf16.mxu0 0
        %675 = vmatpush1.bf16.msra.mxu0 %v578
        %676 = vmatprep.subr.bf16.mxu0 0
        %677 = vmatpush1.bf16.msra.mxu0 %v575
        %678 = vmatprep.subr.bf16.mxu0 0
        %679 = vmatpush1.bf16.msra.mxu0 %v572
        %680 = vmatprep.subr.bf16.mxu0 0
        %681 = vmatpush1.bf16.msra.mxu0 %v569
        %682 = vmatprep.subr.bf16.mxu0 0
        %683 = vmatpush1.bf16.msra.mxu0 %v566
        %684 = vmatprep.subr.bf16.mxu0 0
        %685 = vmatpush1.bf16.msra.mxu0 %v563
        %686 = vmatprep.subr.bf16.mxu0 0
        %687 = vmatpush2.bf16.msra.mxu0 0
        %688 = vmatprep.subr.bf16.mxu0 0
        %689 = vmatpush2.bf16.msra.mxu0 0
        %690 = vmatprep.subr.bf16.mxu0 0
        %691 = vmatpush2.bf16.msra.mxu0 0
        %692 = vmatprep.subr.bf16.mxu0 0
        %693 = vmatpush2.bf16.msra.mxu0 0
        %694 = vmatprep.subr.bf16.mxu0 0
        %695 = vmatpush2.bf16.msra.mxu0 0
        %696 = vmatprep.subr.bf16.mxu0 0
        %697 = vmatpush2.bf16.msra.mxu0 0
        %698 = vmatprep.subr.bf16.mxu0 0
        %699 = vmatpush2.bf16.msra.mxu0 0
        %700 = vmatprep.subr.bf16.mxu0 0
        %701 = vmatpush2.bf16.msra.mxu0 0
        %702 = vmatprep.mubr.bf16.mxu0 0
        %703 = vmatmul.mubr.bf16.gmra.mxu0 %v602
        %v704 = vpop.f32.mrf.mxu0
        %v705 = vadd.f32 %v469, %v704
        %v706 = vpop.f32.mrf.mxu0
        %v707 = vpop.f32.mrf.mxu0
        %v708 = vadd.f32 %v474, %v707
        %v709 = vpop.f32.mrf.mxu0
        %710 = vmatprep.mubr.bf16.mxu0 0
        %711 = vmatmul.mubr.bf16.gmra.mxu0 %v605
        %v712 = vpop.f32.mrf.mxu0
        %v713 = vadd.f32 %v479, %v712
        %v714 = vpop.f32.mrf.mxu0
        %v715 = vpop.f32.mrf.mxu0
        %v716 = vadd.f32 %v484, %v715
        %v717 = vpop.f32.mrf.mxu0
        %718 = vdwg.mxu0
        %v719 = vmax.f32 %v652, 0.0
        %v720 = vmax.f32 %v654, 0.0
        %v721 = vmax.f32 %v705, 0.0
        %v722 = vmax.f32 %v656, 0.0
        %v723 = vmax.f32 %v658, 0.0
        %v724 = vmax.f32 %v708, 0.0
        %v725 = vmax.f32 %v662, 0.0
        %v726 = vmax.f32 %v664, 0.0
        %v727 = vmax.f32 %v713, 0.0
        %v728 = vmax.f32 %v666, 0.0
        %v729 = vmax.f32 %v668, 0.0
        %v730 = vmax.f32 %v716, 0.0
        %732 = vset.pattern.permute.xlu0 0
        %733 = vperm.xlu0 %732, %v179
        %v734 = vpop.permute.xlu0 %733
        %737 = vset.pattern.permute.xlu0 0
        %738 = vperm.xlu0 %737, %v180
        %v739 = vpop.permute.xlu0 %738
        %742 = vset.pattern.permute.xlu0 0
        %743 = vperm.xlu0 %742, %v181
        %v744 = vpop.permute.xlu0 %743
        %747 = vset.pattern.permute.xlu0 0
        %748 = vperm.xlu0 %747, %v182
        %v749 = vpop.permute.xlu0 %748
        %v751 = vmul.f32 %v719, %v734
        %v752 = vmul.f32 %v720, %v734
        %v753 = vmul.f32 %v721, %v734
        %v754 = vmul.f32 %v722, %v739
        %v755 = vmul.f32 %v723, %v739
        %v756 = vmul.f32 %v724, %v739
        %v757 = vmul.f32 %v725, %v744
        %v758 = vmul.f32 %v726, %v744
        %v759 = vmul.f32 %v727, %v744
        %v760 = vmul.f32 %v728, %v749
        %v761 = vmul.f32 %v729, %v749
        %v762 = vmul.f32 %v730, %v749
        %764 = vset.pattern.permute.xlu0 0
        %765 = vperm.xlu0 %764, %v184
        %v766 = vpop.permute.xlu0 %765
        %769 = vset.pattern.permute.xlu0 0
        %770 = vperm.xlu0 %769, %v185
        %v771 = vpop.permute.xlu0 %770
        %774 = vset.pattern.permute.xlu0 0
        %775 = vperm.xlu0 %774, %v186
        %v776 = vpop.permute.xlu0 %775
        %779 = vset.pattern.permute.xlu0 0
        %780 = vperm.xlu0 %779, %v187
        %v781 = vpop.permute.xlu0 %780
        %v783 = vadd.f32 %v751, %v766
        %v784 = vadd.f32 %v752, %v766
        %v785 = vadd.f32 %v753, %v766
        %v786 = vadd.f32 %v754, %v771
        %v787 = vadd.f32 %v755, %v771
        %v788 = vadd.f32 %v756, %v771
        %v789 = vadd.f32 %v757, %v776
        %v790 = vadd.f32 %v758, %v776
        %v791 = vadd.f32 %v759, %v776
        %v792 = vadd.f32 %v760, %v781
        %v793 = vadd.f32 %v761, %v781
        %v794 = vadd.f32 %v762, %v781
        %v795 = vpack.c.bf16 %v786, %v783
        %v796 = vpack.c.bf16 %v787, %v784
        %v797 = vpack.c.bf16 %v788, %v785
        %v798 = vpack.c.bf16 %v792, %v789
        %v799 = vpack.c.bf16 %v793, %v790
        %v800 = vpack.c.bf16 %v794, %v791
        %v807 = vunpack.c.l.b16 %v795
        %v808 = vunpack.c.l.b16 %v796
        %v809 = vunpack.c.l.b16 %v797
        %v810 = vunpack.c.h.b16 %v795
        %v811 = vunpack.c.h.b16 %v796
        %v812 = vunpack.c.h.b16 %v797
        %v813 = vunpack.c.l.b16 %v798
        %v814 = vunpack.c.l.b16 %v799
        %v815 = vunpack.c.l.b16 %v800
        %v816 = vunpack.c.h.b16 %v798
        %v817 = vunpack.c.h.b16 %v799
        %v818 = vunpack.c.h.b16 %v800
        %v819 = vpack.c.b16 %v808, %v807
        %v820 = vpack.c.b16 %v809, %v809
        %v821 = vpack.c.b16 %v811, %v810
        %v822 = vpack.c.b16 %v812, %v812
        %v823 = vpack.c.b16 %v814, %v813
        %v824 = vpack.c.b16 %v815, %v815
        %v825 = vpack.c.b16 %v817, %v816
        %v826 = vpack.c.b16 %v818, %v818
        %835 = vst [vmem:[%s163] sm:$0xff] %v819
        %836 = vst [vmem:[%s163 + $0x8] sm:$0xf] %v820
        %837 = vst [vmem:[%s163 + $0xc] sm:$0xff] %v821
        %838 = vst [vmem:[%s163 + $0x14] sm:$0xf] %v822
        %839 = vst [vmem:[%s163 + $0x18] sm:$0xff] %v823
        %840 = vst [vmem:[%s163 + $0x20] sm:$0xf] %v824
        %841 = vst [vmem:[%s163 + $0x24] sm:$0xff] %v825
        %842 = vst [vmem:[%s163 + $0x2c] sm:$0xf] %v826
        %s843 = sand.u32 %s93, 1
        %s844 = scalar_lea.sflag [#allocation4], %s843
        %s845 = sand.u32 %s93, 1
        %s846 = smul.addr %s845, 48
        %s847 = scalar_lea.vmem [#allocation3], %s846
        // Predicated region
        $region33: #{tpu_custom_call.1} parent=31 // pred_check
          %p848 = pneg %p103
        $region34: #{tpu_custom_call.1} parent=31 // pred_check_branch
          %850 = sbr.rel (%p848) target = $region36
        $region35: #{tpu_custom_call.1} parent=31 // pred_region
          %s852 = ssub.s32 768, 768
          %853 = vsyncadd %s844, %s852
          %s854 = smul.addr %s17, 12
          %s855 = smul.addr %s854, 64
          %s856 = scalar_lea.hbm %s3, %s855
          %s857 = sshll.u32 %s847, 4
          %s858 = int_to_ptr.vmem [resolvable:$true] %s857
          %863 = dma.vmem_to_hbm [thread:$0]  %s858, 768, %s856, %s844, 192, 192, 12
        $region36: #{tpu_custom_call.1} parent=31 // pred_fallthru
          _
      $region32: #{tpu_custom_call.1} parent=5 // pred_fallthru
        _
      %p864 = scmp.le.s32.totalorder 2, %s12
      // Predicated region
      $region37: #{tpu_custom_call.1} parent=5 // pred_check
        %p865 = pneg %p864
      $region38: #{tpu_custom_call.1} parent=5 // pred_check_branch
        %867 = sbr.rel (%p865) target = $region40
      $region39: #{tpu_custom_call.1} parent=5 // pred_region
        %s868 = ssub.s32 %s12, 2
        // Predicated region
        $region41: #{tpu_custom_call.1} parent=39 // pred_check
          %p869 = pneg %p109
        $region42: #{tpu_custom_call.1} parent=39 // pred_check_branch
          %871 = sbr.rel (%p869) target = $region44
        $region43: #{tpu_custom_call.1} parent=39 // pred_region
          %s872 = sand.u32 %s94, 1
          %s873 = scalar_lea.sflag [#allocation4], %s872
          %s874 = sand.u32 %s94, 1
          %s875 = smul.addr %s874, 48
          %s876 = scalar_lea.vmem [#allocation3], %s875
          %877 = dma.done %s873, 768
        $region44: #{tpu_custom_call.1} parent=39 // pred_fallthru
          _
      $region40: #{tpu_custom_call.1} parent=5 // pred_fallthru
        _
    $region6: #{tpu_custom_call.1} parent=1 // loop_footer
      %s16 = sadd.s32 1, %s12
    $region7: #{tpu_custom_call.1} parent=1 // loop_footer_branch
      %11 = sbr.rel target = $region3
    $region8: #{tpu_custom_call.1} parent=1 // loop_exit
      _
    %878 = vsyncpa [#allocation4], 1
    %s879 = scalar_lea.sflag [#allocation4], 1
    %880 = vsyncpa %s879, 1

</llo_original>
